<compile_context>
chip_gen: v7x
topology: tpu7x:2x2x1
jax: 0.10.0
libtpu: 0.0.40
codegen_flags: <defaults>
</compile_context>

<pallas_src>
import functools

import jax
import jax.numpy as jnp
from jax import lax
from jax.experimental import pallas as pl
from jax.experimental.pallas import tpu as pltpu


# ---------------------------------------------------------------------------
# Pass 1: per-channel sum / sum-of-squares of the conv output (no y writeback)
# ---------------------------------------------------------------------------
def conv_stats_kernel(w_ref, p_ref, sum_ref, sq_ref, *, compute_dtype):
    # w_ref:   (tile_co, ck2)    f32 weight tile      (cast to compute dtype in VMEM)
    # p_ref:   (ck2, tile_hw)    f32 input tile       (cast to compute dtype in VMEM)
    # sum_ref: (tile_co, 128)    lane-dense partial sums   (resident over the HW axis)
    # sq_ref:  (tile_co, 128)    lane-dense partial sum^2  (resident over the HW axis)
    @pl.when(pl.program_id(2) == 0)
    def _init():
        sum_ref[...] = jnp.zeros_like(sum_ref)
        sq_ref[...] = jnp.zeros_like(sq_ref)

    y = jnp.dot(w_ref[...].astype(compute_dtype),
                p_ref[...].astype(compute_dtype),
                preferred_element_type=jnp.float32)       # (tile_co, tile_hw) f32

    # Fold tile_hw into 128-lane groups with plain VPU adds: tile-aligned lane
    # slices, no cross-lane (XLU) reduce and no narrow masked stores per step.
    tile_co, tile_hw = y.shape
    s = jnp.zeros((tile_co, 128), jnp.float32)
    q = jnp.zeros((tile_co, 128), jnp.float32)
    for g in range(tile_hw // 128):
        c = y[:, g * 128:(g + 1) * 128]
        s = s + c
        q = q + c * c
    sum_ref[...] += s
    sq_ref[...] += q


# ---------------------------------------------------------------------------
# Pass 2: recompute the conv tile and apply the folded BN affine in one shot
# ---------------------------------------------------------------------------
def conv_bn_kernel(w_ref, p_ref, scale_ref, shift_ref, o_ref, *, compute_dtype):
    y = jnp.dot(w_ref[...].astype(compute_dtype),
                p_ref[...].astype(compute_dtype),
                preferred_element_type=jnp.float32)       # (tile_co, tile_hw)
    o_ref[...] = (y * scale_ref[...] + shift_ref[...]).astype(o_ref.dtype)


# ---------------------------------------------------------------------------
# Helpers
# ---------------------------------------------------------------------------
def _round_up(x, m):
    return ((x + m - 1) // m) * m


def _pick_tile_co(c_out, cap):
    """Largest multiple of 8 <= cap that divides round_up(c_out, 8)."""
    c8 = _round_up(c_out, 8)
    cap = max(8, (min(cap, c8) // 8) * 8)
    for t in range(cap, 7, -8):
        if c8 % t == 0:
            return t, c8
    return 8, c8


def _pick_tiles(c_out, ck2, hw, max_tile_co, max_tile_hw, vmem_budget):
    """Choose (tile_co, c_out_padded, tile_hw) that fit the VMEM budget."""
    cap_co = max(8, max_tile_co)
    tile_co, c_out_p = _pick_tile_co(c_out, cap_co)
    tile_hw = min(max(128, (max_tile_hw // 128) * 128), _round_up(hw, 128))

    def fits(tc, th):
        # Double-buffered f32 blocks of the heavier pass-2 call.
        return 2 * 4 * (tc * ck2 + ck2 * th + tc * th + 2 * tc * 128) <= vmem_budget

    while not fits(tile_co, tile_hw):
        if tile_hw > 128:
            tile_hw = max(128, ((tile_hw // 2) // 128) * 128)
        elif cap_co > 8:
            cap_co = max(8, cap_co // 2)
            tile_co, c_out_p = _pick_tile_co(c_out, cap_co)
        else:
            # TODO(synk): add a ck2 reduction grid axis (+ VMEM f32 accumulator)
            # for the case where ck2 alone exceeds the VMEM budget.
            break
    return tile_co, c_out_p, tile_hw


def _flatten_patches(x, kernel_size, padding):
    """x: (N, C, H, W) -> (N, C*K*K, Ho*Wo) f32, plus (Ho, Wo).

    For K=1 / padding=0 this is a free reshape (no HBM traffic)."""
    n, c, h, w = x.shape
    k = kernel_size
    ho = h + 2 * padding - k + 1
    wo = w + 2 * padding - k + 1
    if k == 1 and padding == 0:
        return x.reshape(n, c, h * w), ho, wo
    # TODO(synk): replace this materialized im2col (K^2 x input HBM traffic)
    # with in-kernel shifted matmuls accumulated over (ki, kj).
    xp = jnp.pad(x, ((0, 0), (0, 0), (padding, padding), (padding, padding)))
    cols = [xp[:, :, i:i + ho, j:j + wo] for i in range(k) for j in range(k)]
    p = jnp.stack(cols, axis=2)                           # (N, C, K*K, Ho, Wo)
    return p.reshape(n, c * k * k, ho * wo), ho, wo


# ---------------------------------------------------------------------------
# Forward: Conv2d(bias=False) + BatchNorm2d (training-mode batch statistics)
# ---------------------------------------------------------------------------
def conv_module_forward(x, weight, gamma, beta, *, kernel_size=1, padding=0,
                        eps=1e-3, compute_dtype=jnp.bfloat16,
                        max_tile_co=256, max_tile_hw=2048,
                        vmem_limit_bytes=48 * 1024 * 1024):
    """x: (N, C_in, H, W) f32; weight: (C_out, C_in, K, K) f32 (OIHW);
    gamma/beta: (C_out,) f32.  Returns (N, C_out, Ho, Wo) f32 (NCHW)."""
    n, c_in, h, w = x.shape
    c_out = weight.shape[0]
    k = kernel_size

    patches, ho, wo = _flatten_patches(x, k, padding)      # (N, ck2, HW) f32
    ck2 = c_in * k * k
    hw = ho * wo

    # ---- tiling: (8,128)-aligned, padded HW, VMEM-budgeted -----------------
    tile_co, c_out_p, tile_hw = _pick_tiles(
        c_out, ck2, hw, max_tile_co, max_tile_hw,
        vmem_budget=int(vmem_limit_bytes * 0.8))
    hw_p = _round_up(hw, tile_hw)
    n_co = c_out_p // tile_co
    n_hw = hw_p // tile_hw

    # Lane padding of HW -> unmasked lane-dense stores; zero pad columns give
    # zero conv outputs so sum/sumsq are unaffected (divisor uses real count).
    if hw_p != hw:
        patches = jnp.pad(patches, ((0, 0), (0, 0), (0, hw_p - hw)))

    # Weights stay f32 in HBM (cast happens inside the kernel, in VMEM).
    w_flat = weight.reshape(c_out, ck2).astype(jnp.float32)
    if c_out_p != c_out:
        w_flat = jnp.pad(w_flat, ((0, c_out_p - c_out), (0, 0)))

    mm_flops = 2 * c_out_p * ck2 * hw_p * n
    in_bytes = c_out_p * ck2 * 4 + n * ck2 * hw_p * 4

    # ---- pass 1: per-channel batch statistics ------------------------------
    stats_kernel = functools.partial(conv_stats_kernel, compute_dtype=compute_dtype)
    sum_part, sq_part = pl.pallas_call(
        stats_kernel,
        out_shape=(jax.ShapeDtypeStruct((n, c_out_p, 128), jnp.float32),
                   jax.ShapeDtypeStruct((n, c_out_p, 128), jnp.float32)),
        grid_spec=pltpu.PrefetchScalarGridSpec(
            num_scalar_prefetch=0,
            grid=(n_co, n, n_hw),
            in_specs=[
                pl.BlockSpec((tile_co, ck2), lambda i, b, j: (i, 0)),
                pl.BlockSpec((None, ck2, tile_hw), lambda i, b, j: (b, 0, j)),
            ],
            out_specs=[
                pl.BlockSpec((None, tile_co, 128), lambda i, b, j: (b, i, 0)),
                pl.BlockSpec((None, tile_co, 128), lambda i, b, j: (b, i, 0)),
            ],
        ),
        compiler_params=pltpu.CompilerParams(
            dimension_semantics=("parallel", "parallel", "arbitrary"),
            vmem_limit_bytes=vmem_limit_bytes),
        cost_estimate=pl.CostEstimate(
            flops=mm_flops + 3 * c_out_p * hw_p * n, transcendentals=0,
            bytes_accessed=in_bytes + 2 * n * c_out_p * 128 * 4),
    )(w_flat, patches)

    # ---- fold stats into per-channel scale / shift (tiny JAX glue) ---------
    count = float(n * hw)                        # real element count, not padded
    ch_sum = jnp.sum(sum_part, axis=(0, 2))      # (c_out_p,)
    ch_sq = jnp.sum(sq_part, axis=(0, 2))
    mean = ch_sum / count
    # TODO(synk): switch to shifted sums / Welford for extreme activation means.
    var = jnp.maximum(ch_sq / count - mean * mean, 0.0)
    gamma_p = jnp.pad(gamma.astype(jnp.float32), (0, c_out_p - c_out),
                      constant_values=1.0)
    beta_p = jnp.pad(beta.astype(jnp.float32), (0, c_out_p - c_out))
    inv_std = lax.rsqrt(var + eps)
    scale = (gamma_p * inv_std).reshape(-1, 1)           # (c_out_p, 1)
    shift = (beta_p - mean * gamma_p * inv_std).reshape(-1, 1)

    # ---- pass 2: recompute conv + apply BN affine, single output write -----
    bn_kernel = functools.partial(conv_bn_kernel, compute_dtype=compute_dtype)
    out = pl.pallas_call(
        bn_kernel,
        out_shape=jax.ShapeDtypeStruct((n, c_out_p, hw_p), jnp.float32),
        grid_spec=pltpu.PrefetchScalarGridSpec(
            num_scalar_prefetch=0,
            grid=(n_co, n, n_hw),
            in_specs=[
                pl.BlockSpec((tile_co, ck2), lambda i, b, j: (i, 0)),
                pl.BlockSpec((None, ck2, tile_hw), lambda i, b, j: (b, 0, j)),
                pl.BlockSpec((tile_co, 1), lambda i, b, j: (i, 0)),
                pl.BlockSpec((tile_co, 1), lambda i, b, j: (i, 0)),
            ],
            out_specs=pl.BlockSpec((None, tile_co, tile_hw),
                                   lambda i, b, j: (b, i, j)),
        ),
        compiler_params=pltpu.CompilerParams(
            dimension_semantics=("parallel", "parallel", "parallel"),
            vmem_limit_bytes=vmem_limit_bytes),
        cost_estimate=pl.CostEstimate(
            flops=mm_flops + 2 * c_out_p * hw_p * n, transcendentals=0,
            bytes_accessed=in_bytes + n * c_out_p * hw_p * 4),
    )(w_flat, patches, scale, shift)

    # Only slice when padding was actually introduced (common case: no copy).
    if c_out_p != c_out or hw_p != hw:
        out = out[:, :c_out, :hw]
    return out.reshape(n, c_out, ho, wo)


# ---------------------------------------------------------------------------
# Plain-JAX reference (PyTorch ConvModule semantics, f32)
# ---------------------------------------------------------------------------
def conv_module_ref(x, weight, gamma, beta, *, padding=0, eps=1e-3):
    y = lax.conv_general_dilated(
        x, weight, window_strides=(1, 1),
        padding=[(padding, padding), (padding, padding)],
        dimension_numbers=("NCHW", "OIHW", "NCHW"))
    mean = jnp.mean(y, axis=(0, 2, 3), keepdims=True)
    var = jnp.mean((y - mean) ** 2, axis=(0, 2, 3), keepdims=True)  # biased
    y = (y - mean) * lax.rsqrt(var + eps)
    return y * gamma.reshape(1, -1, 1, 1) + beta.reshape(1, -1, 1, 1)


if __name__ == "__main__":
    # Small shapes consistent with the module defaults (kernel_size=1, pad=0).
    N, C_IN, C_OUT, H, W = 2, 4, 16, 16, 16
    K, PAD = 1, 0

    key = jax.random.PRNGKey(0)
    kx, kw, kg, kb = jax.random.split(key, 4)

    x = jax.random.normal(kx, (N, C_IN, H, W), dtype=jnp.float32)
    fan_in = C_IN * K * K
    weight = jax.random.uniform(kw, (C_OUT, C_IN, K, K), jnp.float32,
                                minval=-1.0, maxval=1.0) / jnp.sqrt(fan_in)
    gamma = 1.0 + 0.1 * jax.random.normal(kg, (C_OUT,), jnp.float32)
    beta = 0.1 * jax.random.normal(kb, (C_OUT,), jnp.float32)

    ref = conv_module_ref(x, weight, gamma, beta, padding=PAD, eps=1e-3)

    # (a) small tile caps so the test exercises multi-block C_out (2), HW (2)
    #     and the cross-HW resident stats accumulation, in f32 and bf16.
    small = dict(kernel_size=K, padding=PAD, eps=1e-3,
                 max_tile_co=8, max_tile_hw=128)
    fwd_f32 = jax.jit(functools.partial(conv_module_forward,
                                        compute_dtype=jnp.float32, **small))
    fwd_bf16 = jax.jit(functools.partial(conv_module_forward,
                                         compute_dtype=jnp.bfloat16, **small))
    # (b) default (large-tile) configuration: single-block path.
    fwd_default = jax.jit(functools.partial(conv_module_forward,
                                            kernel_size=K, padding=PAD, eps=1e-3,
                                            compute_dtype=jnp.bfloat16))

    out_f32 = jax.block_until_ready(fwd_f32(x, weight, gamma, beta))
    assert out_f32.shape == (N, C_OUT, H, W)
    assert jnp.allclose(out_f32, ref, rtol=1e-4, atol=1e-4)

    out_bf16 = jax.block_until_ready(fwd_bf16(x, weight, gamma, beta))
    assert out_bf16.shape == (N, C_OUT, H, W)
    # bf16 MXU operands (f32 accumulation / f32 BN) -> ~1e-2 level error.
    assert jnp.allclose(out_bf16, ref, rtol=3e-2, atol=3e-2)

    out_def = jax.block_until_ready(fwd_default(x, weight, gamma, beta))
    assert out_def.shape == (N, C_OUT, H, W)
    assert jnp.allclose(out_def, ref, rtol=3e-2, atol=3e-2)

    print("KERNEL_OK")
</pallas_src>

<mosaic_0001>
module attributes {stable_mosaic.version = 11 : i64} {
  func.func @conv_stats_kernel(%arg0: i32, %arg1: i32, %arg2: i32, %arg3: memref<8x4xf32, #tpu.memory_space<vmem>>, %arg4: memref<1x4x128xf32, #tpu.memory_space<vmem>>, %arg5: memref<1x8x128xf32, #tpu.memory_space<vmem>>, %arg6: memref<1x8x128xf32, #tpu.memory_space<vmem>>) attributes {dimension_semantics = [#tpu.dimension_semantics<parallel>, #tpu.dimension_semantics<parallel>, #tpu.dimension_semantics<arbitrary>], iteration_bounds = array<i64: 2, 2, 2>, scalar_prefetch = 0 : i64, scratch_operands = 0 : i64, tpu.core_type = #tpu.core_type<tc>, window_params = [{transform_indices = @transform_0, window_bounds = array<i64: 8, 4>}, {transform_indices = @transform_1, window_bounds = array<i64: 1, 4, 128>}, {transform_indices = @transform_2, window_bounds = array<i64: 1, 8, 128>}, {transform_indices = @transform_3, window_bounds = array<i64: 1, 8, 128>}]} {
    %c0_i32 = arith.constant 0 : i32
    %0 = arith.cmpi eq, %arg2, %c0_i32 : i32
    %1 = arith.extui %0 : i1 to i32
    %c0_i32_0 = arith.constant 0 : i32
    %2 = arith.cmpi ne, %1, %c0_i32_0 : i32
    scf.if %2 {
      %cst_19 = arith.constant 0.000000e+00 : f32
      %24 = vector.broadcast %cst_19 : f32 to vector<8x128xf32>
      %c0_20 = arith.constant 0 : index
      %c0_21 = arith.constant 0 : index
      %c0_22 = arith.constant 0 : index
      %25 = vector.load %arg5[%c0_20, %c0_21, %c0_22] : memref<1x8x128xf32, #tpu.memory_space<vmem>>, vector<1x8x128xf32>
      %26 = vector.shape_cast %25 : vector<1x8x128xf32> to vector<8x128xf32>
      %27 = vector.shape_cast %24 : vector<8x128xf32> to vector<1x8x128xf32>
      tpu.vector_store %arg5[%c0_20, %c0_21, %c0_22], %27 {strides = array<i32>} : memref<1x8x128xf32, #tpu.memory_space<vmem>>, vector<1x8x128xf32>,
      %cst_23 = arith.constant 0.000000e+00 : f32
      %28 = vector.broadcast %cst_23 : f32 to vector<8x128xf32>
      %c0_24 = arith.constant 0 : index
      %c0_25 = arith.constant 0 : index
      %c0_26 = arith.constant 0 : index
      %29 = vector.load %arg6[%c0_24, %c0_25, %c0_26] : memref<1x8x128xf32, #tpu.memory_space<vmem>>, vector<1x8x128xf32>
      %30 = vector.shape_cast %29 : vector<1x8x128xf32> to vector<8x128xf32>
      %31 = vector.shape_cast %28 : vector<8x128xf32> to vector<1x8x128xf32>
      tpu.vector_store %arg6[%c0_24, %c0_25, %c0_26], %31 {strides = array<i32>} : memref<1x8x128xf32, #tpu.memory_space<vmem>>, vector<1x8x128xf32>,
    } else {
    }
    %c0 = arith.constant 0 : index
    %c0_1 = arith.constant 0 : index
    %3 = vector.load %arg3[%c0, %c0_1] : memref<8x4xf32, #tpu.memory_space<vmem>>, vector<8x4xf32>
    %c0_2 = arith.constant 0 : index
    %c0_3 = arith.constant 0 : index
    %c0_4 = arith.constant 0 : index
    %4 = vector.load %arg4[%c0_2, %c0_3, %c0_4] : memref<1x4x128xf32, #tpu.memory_space<vmem>>, vector<1x4x128xf32>
    %5 = vector.shape_cast %4 : vector<1x4x128xf32> to vector<4x128xf32>
    %cst = arith.constant dense<0.000000e+00> : vector<8x128xf32>
    %6 = tpu.matmul %3, %5, %cst {dimension_numbers = #tpu.dot_dimension_numbers<[1], [0], [0], [1], [0, 0, 1, 1], [], []>} : vector<8x4xf32>, vector<4x128xf32>, vector<8x128xf32> -> vector<8x128xf32>
    %cst_5 = arith.constant 0.000000e+00 : f32
    %7 = vector.broadcast %cst_5 : f32 to vector<8x128xf32>
    %cst_6 = arith.constant 0.000000e+00 : f32
    %8 = vector.broadcast %cst_6 : f32 to vector<8x128xf32>
    %9 = arith.addf %7, %6 : vector<8x128xf32>
    %10 = arith.mulf %6, %6 : vector<8x128xf32>
    %11 = arith.addf %8, %10 : vector<8x128xf32>
    %c0_7 = arith.constant 0 : index
    %c0_8 = arith.constant 0 : index
    %c0_9 = arith.constant 0 : index
    %12 = vector.load %arg5[%c0_7, %c0_8, %c0_9] : memref<1x8x128xf32, #tpu.memory_space<vmem>>, vector<1x8x128xf32>
    %13 = vector.shape_cast %12 : vector<1x8x128xf32> to vector<8x128xf32>
    %14 = arith.addf %13, %9 : vector<8x128xf32>
    %c0_10 = arith.constant 0 : index
    %c0_11 = arith.constant 0 : index
    %c0_12 = arith.constant 0 : index
    %15 = vector.load %arg5[%c0_10, %c0_11, %c0_12] : memref<1x8x128xf32, #tpu.memory_space<vmem>>, vector<1x8x128xf32>
    %16 = vector.shape_cast %15 : vector<1x8x128xf32> to vector<8x128xf32>
    %17 = vector.shape_cast %14 : vector<8x128xf32> to vector<1x8x128xf32>
    tpu.vector_store %arg5[%c0_10, %c0_11, %c0_12], %17 {strides = array<i32>} : memref<1x8x128xf32, #tpu.memory_space<vmem>>, vector<1x8x128xf32>,
    %c0_13 = arith.constant 0 : index
    %c0_14 = arith.constant 0 : index
    %c0_15 = arith.constant 0 : index
    %18 = vector.load %arg6[%c0_13, %c0_14, %c0_15] : memref<1x8x128xf32, #tpu.memory_space<vmem>>, vector<1x8x128xf32>
    %19 = vector.shape_cast %18 : vector<1x8x128xf32> to vector<8x128xf32>
    %20 = arith.addf %19, %11 : vector<8x128xf32>
    %c0_16 = arith.constant 0 : index
    %c0_17 = arith.constant 0 : index
    %c0_18 = arith.constant 0 : index
    %21 = vector.load %arg6[%c0_16, %c0_17, %c0_18] : memref<1x8x128xf32, #tpu.memory_space<vmem>>, vector<1x8x128xf32>
    %22 = vector.shape_cast %21 : vector<1x8x128xf32> to vector<8x128xf32>
    %23 = vector.shape_cast %20 : vector<8x128xf32> to vector<1x8x128xf32>
    tpu.vector_store %arg6[%c0_16, %c0_17, %c0_18], %23 {strides = array<i32>} : memref<1x8x128xf32, #tpu.memory_space<vmem>>, vector<1x8x128xf32>,
    return
  }
  func.func @transform_0(%arg0: i32, %arg1: i32, %arg2: i32) -> (i32, i32) {
    %c0_i32 = arith.constant 0 : i32
    %c0_i32_0 = arith.constant 0 : i32
    return %arg0, %c0_i32 : i32, i32
  }
  func.func @transform_1(%arg0: i32, %arg1: i32, %arg2: i32) -> (i32, i32, i32) {
    %c0_i32 = arith.constant 0 : i32
    %c0_i32_0 = arith.constant 0 : i32
    return %arg1, %c0_i32, %arg2 : i32, i32, i32
  }
  func.func @transform_2(%arg0: i32, %arg1: i32, %arg2: i32) -> (i32, i32, i32) {
    %c0_i32 = arith.constant 0 : i32
    %c0_i32_0 = arith.constant 0 : i32
    return %arg1, %arg0, %c0_i32 : i32, i32, i32
  }
  func.func @transform_3(%arg0: i32, %arg1: i32, %arg2: i32) -> (i32, i32, i32) {
    %c0_i32 = arith.constant 0 : i32
    %c0_i32_0 = arith.constant 0 : i32
    return %arg1, %arg0, %c0_i32 : i32, i32, i32
  }
}

module attributes {stable_mosaic.version = 11 : i64} {
  func.func @conv_bn_kernel(%arg0: i32, %arg1: i32, %arg2: i32, %arg3: memref<8x4xf32, #tpu.memory_space<vmem>>, %arg4: memref<1x4x128xf32, #tpu.memory_space<vmem>>, %arg5: memref<8x1xf32, #tpu.memory_space<vmem>>, %arg6: memref<8x1xf32, #tpu.memory_space<vmem>>, %arg7: memref<1x8x128xf32, #tpu.memory_space<vmem>>) attributes {dimension_semantics = [#tpu.dimension_semantics<parallel>, #tpu.dimension_semantics<parallel>, #tpu.dimension_semantics<parallel>], iteration_bounds = array<i64: 2, 2, 2>, scalar_prefetch = 0 : i64, scratch_operands = 0 : i64, tpu.core_type = #tpu.core_type<tc>, window_params = [{transform_indices = @transform_0, window_bounds = array<i64: 8, 4>}, {transform_indices = @transform_1, window_bounds = array<i64: 1, 4, 128>}, {transform_indices = @transform_2, window_bounds = array<i64: 8, 1>}, {transform_indices = @transform_3, window_bounds = array<i64: 8, 1>}, {transform_indices = @transform_4, window_bounds = array<i64: 1, 8, 128>}]} {
    %c0 = arith.constant 0 : index
    %c0_0 = arith.constant 0 : index
    %0 = vector.load %arg3[%c0, %c0_0] : memref<8x4xf32, #tpu.memory_space<vmem>>, vector<8x4xf32>
    %c0_1 = arith.constant 0 : index
    %c0_2 = arith.constant 0 : index
    %c0_3 = arith.constant 0 : index
    %1 = vector.load %arg4[%c0_1, %c0_2, %c0_3] : memref<1x4x128xf32, #tpu.memory_space<vmem>>, vector<1x4x128xf32>
    %2 = vector.shape_cast %1 : vector<1x4x128xf32> to vector<4x128xf32>
    %cst = arith.constant dense<0.000000e+00> : vector<8x128xf32>
    %3 = tpu.matmul %0, %2, %cst {dimension_numbers = #tpu.dot_dimension_numbers<[1], [0], [0], [1], [0, 0, 1, 1], [], []>} : vector<8x4xf32>, vector<4x128xf32>, vector<8x128xf32> -> vector<8x128xf32>
    %c0_4 = arith.constant 0 : index
    %c0_5 = arith.constant 0 : index
    %4 = vector.load %arg5[%c0_4, %c0_5] : memref<8x1xf32, #tpu.memory_space<vmem>>, vector<8x1xf32>
    %5 = vector.broadcast %4 : vector<8x1xf32> to vector<8x128xf32>
    %6 = arith.mulf %3, %5 : vector<8x128xf32>
    %c0_6 = arith.constant 0 : index
    %c0_7 = arith.constant 0 : index
    %7 = vector.load %arg6[%c0_6, %c0_7] : memref<8x1xf32, #tpu.memory_space<vmem>>, vector<8x1xf32>
    %8 = vector.broadcast %7 : vector<8x1xf32> to vector<8x128xf32>
    %9 = arith.addf %6, %8 : vector<8x128xf32>
    %c0_8 = arith.constant 0 : index
    %c0_9 = arith.constant 0 : index
    %c0_10 = arith.constant 0 : index
    %10 = vector.load %arg7[%c0_8, %c0_9, %c0_10] : memref<1x8x128xf32, #tpu.memory_space<vmem>>, vector<1x8x128xf32>
    %11 = vector.shape_cast %10 : vector<1x8x128xf32> to vector<8x128xf32>
    %12 = vector.shape_cast %9 : vector<8x128xf32> to vector<1x8x128xf32>
    tpu.vector_store %arg7[%c0_8, %c0_9, %c0_10], %12 {strides = array<i32>} : memref<1x8x128xf32, #tpu.memory_space<vmem>>, vector<1x8x128xf32>,
    return
  }
  func.func @transform_0(%arg0: i32, %arg1: i32, %arg2: i32) -> (i32, i32) {
    %c0_i32 = arith.constant 0 : i32
    %c0_i32_0 = arith.constant 0 : i32
    return %arg0, %c0_i32 : i32, i32
  }
  func.func @transform_1(%arg0: i32, %arg1: i32, %arg2: i32) -> (i32, i32, i32) {
    %c0_i32 = arith.constant 0 : i32
    %c0_i32_0 = arith.constant 0 : i32
    return %arg1, %c0_i32, %arg2 : i32, i32, i32
  }
  func.func @transform_2(%arg0: i32, %arg1: i32, %arg2: i32) -> (i32, i32) {
    %c0_i32 = arith.constant 0 : i32
    %c0_i32_0 = arith.constant 0 : i32
    return %arg0, %c0_i32 : i32, i32
  }
  func.func @transform_3(%arg0: i32, %arg1: i32, %arg2: i32) -> (i32, i32) {
    %c0_i32 = arith.constant 0 : i32
    %c0_i32_0 = arith.constant 0 : i32
    return %arg0, %c0_i32 : i32, i32
  }
  func.func @transform_4(%arg0: i32, %arg1: i32, %arg2: i32) -> (i32, i32, i32) {
    %c0_i32 = arith.constant 0 : i32
    return %arg1, %arg0, %arg2 : i32, i32, i32
  }
}

</mosaic_0001>

<llo_original>
// kernel: conv_module_forward.3
$region0: #{conv_module_forward.3}
  #allocation0 [shape = 'u32[]', space=smem, size = 0x4, offset = 0x4, fixed_abs, tag = 'smem constant byte address 0x4 - core index']
  #allocation1 [shape = 'u32[144,128]{1,0:T(1,128)}', space=vmem, size = 0x12000, scoped, tag = 'internal scratch']
  %s0 = inlined_call_operand.vmem [shape: f32[16,4], index: 0, kind: input, shape index: {}]
  %s1 = inlined_call_operand.vmem [shape: f32[2,4,256], index: 1, kind: input, shape index: {}]
  %s2 = inlined_call_operand.vmem [shape: f32[16,1], index: 2, kind: input, shape index: {}]
  %s3 = inlined_call_operand.vmem [shape: f32[16,1], index: 3, kind: input, shape index: {}]
  %s4 = inlined_call_operand.vmem [shape: f32[2,16,256], index: 4, kind: output, shape index: {}]
  %s5 = sld [smem:[#allocation0]]
  $region49: #{conv_module_forward.3} parent=0
    _
  %s7 = ssub.s32 1, %s5
  %s8 = scalar_select 0, %s7, %s5
  loop: start=0, step=1, limit=10
  $region2: #{conv_module_forward.3} parent=0 // loop_pre_header
    _
  $region3: #{conv_module_forward.3} parent=0 // loop_header
    %s10 = sphi 0, %s14
    %p11 = scmp.ge.s32.totalorder %s10, 10
    %s17 = sphi 0, %s36
    %s18 = sphi 0, %s32
    %s19 = sphi 0, %s28
    %s20 = sphi 0, %s17
    %s21 = sphi 0, %s18
    %s22 = sphi 0, %s19
    %s23 = sphi 0, %s20
    %s24 = sphi 0, %s21
    %s25 = sphi 0, %s22
    %s39 = sphi 0, %s41
    %s42 = sphi 0, %s39
    %s43 = sphi 0, %s42
    %s59 = sphi 0, %s43
    %s67 = sphi 0, %s69
    %s70 = sphi 0, %s67
    %s71 = sphi 0, %s70
    %s87 = sphi 0, %s71
    %s93 = sphi 0, %s95
    %s96 = sphi 0, %s93
    %s97 = sphi 0, %s96
    %s113 = sphi 0, %s97
    %s119 = sphi 0, %s121
    %s122 = sphi 0, %s119
    %s123 = sphi 0, %s122
    %s139 = sphi 0, %s123
    %s149 = sphi 0, %s151
    %s152 = sphi 0, %s149
    %s153 = sphi 0, %s152
    %s169 = sphi 0, %s153
  $region4: #{conv_module_forward.3} parent=0 // loop_header_branch
    %13 = sbr.rel (%p11) target = $region8
  $region5: #{conv_module_forward.3} parent=0 // loop_body
    %s15 = ssub.s32 %s10, 1
    %s16 = ssub.s32 %s10, 2
    %s26 = sadd.s32 1, %s19
    %p27 = scmp.ge.s32.totalorder %s26, 2
    %s28 = scalar_select %p27, 0, %s26
    %s29 = sadd.s32 1, %s18
    %s30 = scalar_select %p27, %s29, %s18
    %p31 = scmp.ge.s32.totalorder %s30, 2
    %s32 = scalar_select %p31, 0, %s30
    %s33 = sadd.s32 1, %s17
    %s34 = scalar_select %p31, %s33, %s17
    %p35 = scmp.ge.s32.totalorder %s34, 2
    %s36 = scalar_select %p35, 0, %s34
    %s37 = ssub.s32 %s17, %s36
    %p38 = scmp.eq.s32.totalorder %s37, 0
    %s40 = sadd.s32 %s39, 1
    %s41 = scalar_select %p38, %s39, %s40
    %p44 = pneg %p38
    %p45 = scmp.eq.s32.totalorder %s10, 7
    %p46 = por %p44, %p45
    %p47 = scmp.ne.s32.totalorder %s39, %s42
    %p48 = scmp.eq.s32.totalorder %s10, 0
    %p49 = por %p47, %p48
    %p50 = scmp.ne.s32.totalorder %s39, %s42
    %p51 = scmp.eq.s32.totalorder %s15, 7
    %p52 = por %p50, %p51
    %p53 = scmp.ne.s32.totalorder %s42, %s43
    %p54 = scmp.eq.s32.totalorder %s15, 0
    %p55 = por %p53, %p54
    %p56 = scmp.ne.s32.totalorder %s42, %s43
    %p57 = scmp.eq.s32.totalorder %s16, 7
    %p58 = por %p56, %p57
    %p60 = scmp.ne.s32.totalorder %s43, %s59
    %p61 = scmp.eq.s32.totalorder %s16, 0
    %p62 = por %p60, %p61
    %s63 = ssub.s32 %s18, %s32
    %s64 = ssub.s32 %s19, %s28
    %s65 = sor.u32 %s63, %s64
    %p66 = scmp.eq.s32.totalorder %s65, 0
    %s68 = sadd.s32 %s67, 1
    %s69 = scalar_select %p66, %s67, %s68
    %p72 = pneg %p66
    %p73 = scmp.eq.s32.totalorder %s10, 7
    %p74 = por %p72, %p73
    %p75 = scmp.ne.s32.totalorder %s67, %s70
    %p76 = scmp.eq.s32.totalorder %s10, 0
    %p77 = por %p75, %p76
    %p78 = scmp.ne.s32.totalorder %s67, %s70
    %p79 = scmp.eq.s32.totalorder %s15, 7
    %p80 = por %p78, %p79
    %p81 = scmp.ne.s32.totalorder %s70, %s71
    %p82 = scmp.eq.s32.totalorder %s15, 0
    %p83 = por %p81, %p82
    %p84 = scmp.ne.s32.totalorder %s70, %s71
    %p85 = scmp.eq.s32.totalorder %s16, 7
    %p86 = por %p84, %p85
    %p88 = scmp.ne.s32.totalorder %s71, %s87
    %p89 = scmp.eq.s32.totalorder %s16, 0
    %p90 = por %p88, %p89
    %s91 = ssub.s32 %s17, %s36
    %p92 = scmp.eq.s32.totalorder %s91, 0
    %s94 = sadd.s32 %s93, 1
    %s95 = scalar_select %p92, %s93, %s94
    %p98 = pneg %p92
    %p99 = scmp.eq.s32.totalorder %s10, 7
    %p100 = por %p98, %p99
    %p101 = scmp.ne.s32.totalorder %s93, %s96
    %p102 = scmp.eq.s32.totalorder %s10, 0
    %p103 = por %p101, %p102
    %p104 = scmp.ne.s32.totalorder %s93, %s96
    %p105 = scmp.eq.s32.totalorder %s15, 7
    %p106 = por %p104, %p105
    %p107 = scmp.ne.s32.totalorder %s96, %s97
    %p108 = scmp.eq.s32.totalorder %s15, 0
    %p109 = por %p107, %p108
    %p110 = scmp.ne.s32.totalorder %s96, %s97
    %p111 = scmp.eq.s32.totalorder %s16, 7
    %p112 = por %p110, %p111
    %p114 = scmp.ne.s32.totalorder %s97, %s113
    %p115 = scmp.eq.s32.totalorder %s16, 0
    %p116 = por %p114, %p115
    %s117 = ssub.s32 %s17, %s36
    %p118 = scmp.eq.s32.totalorder %s117, 0
    %s120 = sadd.s32 %s119, 1
    %s121 = scalar_select %p118, %s119, %s120
    %p124 = pneg %p118
    %p125 = scmp.eq.s32.totalorder %s10, 7
    %p126 = por %p124, %p125
    %p127 = scmp.ne.s32.totalorder %s119, %s122
    %p128 = scmp.eq.s32.totalorder %s10, 0
    %p129 = por %p127, %p128
    %p130 = scmp.ne.s32.totalorder %s119, %s122
    %p131 = scmp.eq.s32.totalorder %s15, 7
    %p132 = por %p130, %p131
    %p133 = scmp.ne.s32.totalorder %s122, %s123
    %p134 = scmp.eq.s32.totalorder %s15, 0
    %p135 = por %p133, %p134
    %p136 = scmp.ne.s32.totalorder %s122, %s123
    %p137 = scmp.eq.s32.totalorder %s16, 7
    %p138 = por %p136, %p137
    %p140 = scmp.ne.s32.totalorder %s123, %s139
    %p141 = scmp.eq.s32.totalorder %s16, 0
    %p142 = por %p140, %p141
    %s143 = ssub.s32 %s18, %s32
    %s144 = ssub.s32 %s17, %s36
    %s145 = sor.u32 %s143, %s144
    %s146 = ssub.s32 %s19, %s28
    %s147 = sor.u32 %s145, %s146
    %p148 = scmp.eq.s32.totalorder %s147, 0
    %s150 = sadd.s32 %s149, 1
    %s151 = scalar_select %p148, %s149, %s150
    %p154 = pneg %p148
    %p155 = scmp.eq.s32.totalorder %s10, 7
    %p156 = por %p154, %p155
    %p157 = scmp.ne.s32.totalorder %s149, %s152
    %p158 = scmp.eq.s32.totalorder %s10, 0
    %p159 = por %p157, %p158
    %p160 = scmp.ne.s32.totalorder %s149, %s152
    %p161 = scmp.eq.s32.totalorder %s15, 7
    %p162 = por %p160, %p161
    %p163 = scmp.ne.s32.totalorder %s152, %s153
    %p164 = scmp.eq.s32.totalorder %s15, 0
    %p165 = por %p163, %p164
    %p166 = scmp.ne.s32.totalorder %s152, %s153
    %p167 = scmp.eq.s32.totalorder %s16, 7
    %p168 = por %p166, %p167
    %p170 = scmp.ne.s32.totalorder %s153, %s169
    %p171 = scmp.eq.s32.totalorder %s16, 0
    %p172 = por %p170, %p171
    %p173 = scmp.le.s32.totalorder 1, %s10
    %p174 = scmp.lt.s32.totalorder %s10, 9
    %p175 = pnand %p173, %p174
    %p176 = pneg %p175
    // Predicated region
    $region9: #{conv_module_forward.3} parent=5 // pred_check
      _
    $region10: #{conv_module_forward.3} parent=5 // pred_check_branch
      %178 = sbr.rel (%p175) target = $region12
    $region11: #{conv_module_forward.3} parent=5 // pred_region
      %s179 = ssub.s32 %s10, 1
    $region12: #{conv_module_forward.3} parent=5 // pred_fallthru
      _
    %p180 = scmp.lt.s32.totalorder %s10, 8
    // Predicated region
    $region13: #{conv_module_forward.3} parent=5 // pred_check
      %p181 = pneg %p180
    $region14: #{conv_module_forward.3} parent=5 // pred_check_branch
      %183 = sbr.rel (%p181) target = $region16
    $region15: #{conv_module_forward.3} parent=5 // pred_region
      // Predicated region
      $region17: #{conv_module_forward.3} parent=15 // pred_check
        %p184 = pneg %p49
      $region18: #{conv_module_forward.3} parent=15 // pred_check_branch
        %186 = sbr.rel (%p184) target = $region20
      $region19: #{conv_module_forward.3} parent=15 // pred_region
        %p187 = scmp.lt.s32.totalorder %s17, 1
        %s188 = scalar_select %p187, %s17, 1
        %s189 = smul.addr %s188, 8
        %s190 = scalar_lea.vmem %s0, %s189
      $region20: #{conv_module_forward.3} parent=15 // pred_fallthru
        _
      // Predicated region
      $region21: #{conv_module_forward.3} parent=15 // pred_check
        %p191 = pneg %p77
      $region22: #{conv_module_forward.3} parent=15 // pred_check_branch
        %193 = sbr.rel (%p191) target = $region24
      $region23: #{conv_module_forward.3} parent=15 // pred_region
        %p194 = scmp.lt.s32.totalorder %s18, 1
        %s195 = scalar_select %p194, %s18, 1
        %p196 = scmp.lt.s32.totalorder %s19, 1
        %s197 = scalar_select %p196, %s19, 1
        %s198 = smul.addr %s195, 2
        %s199 = sadd.s32 %s197, %s198
        %s200 = smul.addr %s199, 4
        %s201 = scalar_lea.vmem %s1, %s200
      $region24: #{conv_module_forward.3} parent=15 // pred_fallthru
        _
      // Predicated region
      $region25: #{conv_module_forward.3} parent=15 // pred_check
        %p202 = pneg %p103
      $region26: #{conv_module_forward.3} parent=15 // pred_check_branch
        %204 = sbr.rel (%p202) target = $region28
      $region27: #{conv_module_forward.3} parent=15 // pred_region
        %p205 = scmp.lt.s32.totalorder %s17, 1
        %s206 = scalar_select %p205, %s17, 1
        %s207 = smul.addr %s206, 8
        %s208 = scalar_lea.vmem %s2, %s207
      $region28: #{conv_module_forward.3} parent=15 // pred_fallthru
        _
      // Predicated region
      $region29: #{conv_module_forward.3} parent=15 // pred_check
        %p209 = pneg %p129
      $region30: #{conv_module_forward.3} parent=15 // pred_check_branch
        %211 = sbr.rel (%p209) target = $region32
      $region31: #{conv_module_forward.3} parent=15 // pred_region
        %p212 = scmp.lt.s32.totalorder %s17, 1
        %s213 = scalar_select %p212, %s17, 1
        %s214 = smul.addr %s213, 8
        %s215 = scalar_lea.vmem %s3, %s214
      $region32: #{conv_module_forward.3} parent=15 // pred_fallthru
        _
    $region16: #{conv_module_forward.3} parent=5 // pred_fallthru
      _
    %p216 = scmp.le.s32.totalorder 1, %s10
    %p217 = scmp.lt.s32.totalorder %s10, 9
    %p218 = pnand %p216, %p217
    %p219 = pneg %p218
    // Predicated region
    $region33: #{conv_module_forward.3} parent=5 // pred_check
      _
    $region34: #{conv_module_forward.3} parent=5 // pred_check_branch
      %221 = sbr.rel (%p218) target = $region36
    $region35: #{conv_module_forward.3} parent=5 // pred_region
      %s222 = ssub.s32 %s10, 1
      %p223 = scmp.lt.s32.totalorder %s20, 1
      %s224 = scalar_select %p223, %s20, 1
      %s225 = smul.addr %s224, 8
      %s226 = scalar_lea.vmem %s0, %s225
      %p227 = pneg %p55
      %p228 = pneg %p52
      %p229 = scmp.lt.s32.totalorder %s21, 1
      %s230 = scalar_select %p229, %s21, 1
      %p231 = scmp.lt.s32.totalorder %s22, 1
      %s232 = scalar_select %p231, %s22, 1
      %s233 = smul.addr %s230, 2
      %s234 = sadd.s32 %s232, %s233
      %s235 = smul.addr %s234, 4
      %s236 = scalar_lea.vmem %s1, %s235
      %p237 = pneg %p83
      %p238 = pneg %p80
      %p239 = scmp.lt.s32.totalorder %s20, 1
      %s240 = scalar_select %p239, %s20, 1
      %s241 = smul.addr %s240, 8
      %s242 = scalar_lea.vmem %s2, %s241
      %p243 = pneg %p109
      %p244 = pneg %p106
      %p245 = scmp.lt.s32.totalorder %s20, 1
      %s246 = scalar_select %p245, %s20, 1
      %s247 = smul.addr %s246, 8
      %s248 = scalar_lea.vmem %s3, %s247
      %p249 = pneg %p135
      %p250 = pneg %p132
      %p251 = pneg %p165
      %p252 = pneg %p162
      %p253 = scmp.lt.s32.totalorder %s21, 1
      %s254 = scalar_select %p253, %s21, 1
      %p255 = scmp.lt.s32.totalorder %s20, 1
      %s256 = scalar_select %p255, %s20, 1
      %p257 = scmp.lt.s32.totalorder %s22, 1
      %s258 = scalar_select %p257, %s22, 1
      %s259 = smul.addr %s256, 2
      %s260 = sadd.s32 %s258, %s259
      %s261 = smul.addr %s254, 4
      %s262 = sadd.s32 %s260, %s261
      %s263 = smul.addr %s262, 8
      %s264 = scalar_lea.vmem %s4, %s263
      %p265 = scmp.lt.s32.totalorder %s20, 1
      %s266 = scalar_select %p265, %s20, 1
      %s267 = smul.addr %s266, 8
      %s268 = scalar_lea.vmem %s0, %s267
      %p269 = scmp.lt.s32.totalorder %s21, 1
      %s270 = scalar_select %p269, %s21, 1
      %p271 = scmp.lt.s32.totalorder %s22, 1
      %s272 = scalar_select %p271, %s22, 1
      %s273 = smul.addr %s270, 2
      %s274 = sadd.s32 %s272, %s273
      %s275 = smul.addr %s274, 4
      %s276 = scalar_lea.vmem %s1, %s275
      %p277 = scmp.lt.s32.totalorder %s20, 1
      %s278 = scalar_select %p277, %s20, 1
      %s279 = smul.addr %s278, 8
      %s280 = scalar_lea.vmem %s2, %s279
      %p281 = scmp.lt.s32.totalorder %s20, 1
      %s282 = scalar_select %p281, %s20, 1
      %s283 = smul.addr %s282, 8
      %s284 = scalar_lea.vmem %s3, %s283
      %p285 = scmp.lt.s32.totalorder %s21, 1
      %s286 = scalar_select %p285, %s21, 1
      %p287 = scmp.lt.s32.totalorder %s20, 1
      %s288 = scalar_select %p287, %s20, 1
      %p289 = scmp.lt.s32.totalorder %s22, 1
      %s290 = scalar_select %p289, %s22, 1
      %s291 = smul.addr %s288, 2
      %s292 = sadd.s32 %s290, %s291
      %s293 = smul.addr %s286, 4
      %s294 = sadd.s32 %s292, %s293
      %s295 = smul.addr %s294, 8
      %s296 = scalar_lea.vmem %s4, %s295
      %v297 = vld [vmem:[%s268] sm:$0xff]
      %v298 = vld [vmem:[%s276] sm:$0xf]
      %vm299 = vcmask 31744
      %v301 = vsel %vm299, %v297, 0
      %vm303 = vcmask 1043456
      %v305 = vsel %vm303, %v298, 0
      %307 = vmatprep.subr.mxu0 0.0
      %308 = vmatpush1.msra.mxu0 %v305
      %309 = vmatprep.subr.mxu0 0.0
      %310 = vmatpush1.msra.mxu0 0.0
      %311 = vmatprep.subr.mxu0 0.0
      %312 = vmatpush1.msra.mxu0 0.0
      %313 = vmatprep.subr.mxu0 0.0
      %314 = vmatpush1.msra.mxu0 0.0
      %315 = vmatprep.subr.mxu0 0.0
      %316 = vmatpush1.msra.mxu0 0.0
      %317 = vmatprep.subr.mxu0 0.0
      %318 = vmatpush1.msra.mxu0 0.0
      %319 = vmatprep.subr.mxu0 0.0
      %320 = vmatpush1.msra.mxu0 0.0
      %321 = vmatprep.subr.mxu0 0.0
      %322 = vmatpush1.msra.mxu0 0.0
      %323 = vmatprep.subr.mxu0 0.0
      %324 = vmatpush1.msra.mxu0 0.0
      %325 = vmatprep.subr.mxu0 0.0
      %326 = vmatpush1.msra.mxu0 0.0
      %327 = vmatprep.subr.mxu0 0.0
      %328 = vmatpush1.msra.mxu0 0.0
      %329 = vmatprep.subr.mxu0 0.0
      %330 = vmatpush1.msra.mxu0 0.0
      %331 = vmatprep.subr.mxu0 0.0
      %332 = vmatpush1.msra.mxu0 0.0
      %333 = vmatprep.subr.mxu0 0.0
      %334 = vmatpush1.msra.mxu0 0.0
      %335 = vmatprep.subr.mxu0 0.0
      %336 = vmatpush1.msra.mxu0 0.0
      %337 = vmatprep.subr.mxu0 0.0
      %338 = vmatpush1.msra.mxu0 0.0
      %339 = vmatprep.subr.mxu0 0.0
      %340 = vmatpush1.msra.mxu0 0.0
      %341 = vmatprep.subr.mxu0 0.0
      %342 = vmatpush1.msra.mxu0 0.0
      %343 = vmatprep.subr.mxu0 0.0
      %344 = vmatpush1.msra.mxu0 0.0
      %345 = vmatprep.subr.mxu0 0.0
      %346 = vmatpush1.msra.mxu0 0.0
      %347 = vmatprep.subr.mxu0 0.0
      %348 = vmatpush1.msra.mxu0 0.0
      %349 = vmatprep.subr.mxu0 0.0
      %350 = vmatpush1.msra.mxu0 0.0
      %351 = vmatprep.subr.mxu0 0.0
      %352 = vmatpush1.msra.mxu0 0.0
      %353 = vmatprep.subr.mxu0 0.0
      %354 = vmatpush1.msra.mxu0 0.0
      %355 = vmatprep.subr.mxu0 0.0
      %356 = vmatpush1.msra.mxu0 0.0
      %357 = vmatprep.subr.mxu0 0.0
      %358 = vmatpush1.msra.mxu0 0.0
      %359 = vmatprep.subr.mxu0 0.0
      %360 = vmatpush1.msra.mxu0 0.0
      %361 = vmatprep.subr.mxu0 0.0
      %362 = vmatpush1.msra.mxu0 0.0
      %363 = vmatprep.subr.mxu0 0.0
      %364 = vmatpush1.msra.mxu0 0.0
      %365 = vmatprep.subr.mxu0 0.0
      %366 = vmatpush1.msra.mxu0 0.0
      %367 = vmatprep.subr.mxu0 0.0
      %368 = vmatpush1.msra.mxu0 0.0
      %369 = vmatprep.subr.mxu0 0.0
      %370 = vmatpush1.msra.mxu0 0.0
      %371 = vmatprep.mubr.f32.mxu0 0.0
      %372 = vmatmul.mubr.f32.gmra.mrb[0].mxu0 %v301
      %v373 = vpop.f32.mrb[0].mxu0
      %v374 = vadd.f32 0.0, %v373
      %v375 = vpop.f32.mrb[0].mxu0
      %376 = vdwg.mxu0
      %v377 = vld [vmem:[%s280] sm:$0xff]
      %379 = vset.pattern.permute.xlu0 0
      %380 = vperm.xlu0 %379, %v377
      %v381 = vpop.permute.xlu0 %380
      %v383 = vmul.f32 %v374, %v381
      %v384 = vld [vmem:[%s284] sm:$0xff]
      %386 = vset.pattern.permute.xlu0 0
      %387 = vperm.xlu0 %386, %v384
      %v388 = vpop.permute.xlu0 %387
      %v390 = vadd.f32 %v383, %v388
      %391 = vst [vmem:[%s296] sm:$0xff] %v390
      %p392 = scmp.lt.s32.totalorder %s21, 1
      %s393 = scalar_select %p392, %s21, 1
      %p394 = scmp.lt.s32.totalorder %s20, 1
      %s395 = scalar_select %p394, %s20, 1
      %p396 = scmp.lt.s32.totalorder %s22, 1
      %s397 = scalar_select %p396, %s22, 1
      %s398 = smul.addr %s395, 2
      %s399 = sadd.s32 %s397, %s398
      %s400 = smul.addr %s393, 4
      %s401 = sadd.s32 %s399, %s400
      %s402 = smul.addr %s401, 8
      %s403 = scalar_lea.vmem %s4, %s402
      // Predicated region
      $region37: #{conv_module_forward.3} parent=35 // pred_check
        %p404 = pneg %p162
      $region38: #{conv_module_forward.3} parent=35 // pred_check_branch
        %406 = sbr.rel (%p404) target = $region40
      $region39: #{conv_module_forward.3} parent=35 // pred_region
        _
      $region40: #{conv_module_forward.3} parent=35 // pred_fallthru
        _
    $region36: #{conv_module_forward.3} parent=5 // pred_fallthru
      _
    %p407 = scmp.le.s32.totalorder 2, %s10
    // Predicated region
    $region41: #{conv_module_forward.3} parent=5 // pred_check
      %p408 = pneg %p407
    $region42: #{conv_module_forward.3} parent=5 // pred_check_branch
      %410 = sbr.rel (%p408) target = $region44
    $region43: #{conv_module_forward.3} parent=5 // pred_region
      %s411 = ssub.s32 %s10, 2
      // Predicated region
      $region45: #{conv_module_forward.3} parent=43 // pred_check
        %p412 = pneg %p168
      $region46: #{conv_module_forward.3} parent=43 // pred_check_branch
        %414 = sbr.rel (%p412) target = $region48
      $region47: #{conv_module_forward.3} parent=43 // pred_region
        %p415 = scmp.lt.s32.totalorder %s24, 1
        %s416 = scalar_select %p415, %s24, 1
        %p417 = scmp.lt.s32.totalorder %s23, 1
        %s418 = scalar_select %p417, %s23, 1
        %p419 = scmp.lt.s32.totalorder %s25, 1
        %s420 = scalar_select %p419, %s25, 1
        %s421 = smul.addr %s418, 2
        %s422 = sadd.s32 %s420, %s421
        %s423 = smul.addr %s416, 4
        %s424 = sadd.s32 %s422, %s423
        %s425 = smul.addr %s424, 8
        %s426 = scalar_lea.vmem %s4, %s425
      $region48: #{conv_module_forward.3} parent=43 // pred_fallthru
        _
    $region44: #{conv_module_forward.3} parent=5 // pred_fallthru
      _
  $region6: #{conv_module_forward.3} parent=0 // loop_footer
    %s14 = sadd.s32 1, %s10
  $region7: #{conv_module_forward.3} parent=0 // loop_footer_branch
    %9 = sbr.rel target = $region3
  $region8: #{conv_module_forward.3} parent=0 // loop_exit
    _

// kernel: conv_module_forward.2
$region0: #{conv_module_forward.2}
  #allocation0 [shape = 'u32[]', space=smem, size = 0x4, offset = 0x4, fixed_abs, tag = 'smem constant byte address 0x4 - core index']
  #allocation1 [shape = 'u32[144,128]{1,0:T(1,128)}', space=vmem, size = 0x12000, scoped, tag = 'internal scratch']
  %s0 = inlined_call_operand.vmem [shape: f32[16,4], index: 0, kind: input, shape index: {}]
  %s1 = inlined_call_operand.vmem [shape: f32[2,4,256], index: 1, kind: input, shape index: {}]
  %s2 = inlined_call_operand.vmem [shape: f32[2,16,128], index: 2, kind: output, shape index: {0}]
  %s3 = inlined_call_operand.vmem [shape: f32[2,16,128], index: 3, kind: output, shape index: {1}]
  %4 = xla_tuple %s2, %s3
  %s5 = sld [smem:[#allocation0]]
  $region53: #{conv_module_forward.2} parent=0
    _
  %s7 = ssub.s32 1, %s5
  %s8 = scalar_select 0, %s7, %s5
  loop: start=0, step=1, limit=10
  $region2: #{conv_module_forward.2} parent=0 // loop_pre_header
    _
  $region3: #{conv_module_forward.2} parent=0 // loop_header
    %s10 = sphi 0, %s14
    %p11 = scmp.ge.s32.totalorder %s10, 10
    %s17 = sphi 0, %s36
    %s18 = sphi 0, %s32
    %s19 = sphi 0, %s28
    %s20 = sphi 0, %s17
    %s21 = sphi 0, %s18
    %s22 = sphi 0, %s19
    %s23 = sphi 0, %s20
    %s24 = sphi 0, %s21
    %s25 = sphi 0, %s22
    %s39 = sphi 0, %s41
    %s42 = sphi 0, %s39
    %s43 = sphi 0, %s42
    %s59 = sphi 0, %s43
    %s67 = sphi 0, %s69
    %s70 = sphi 0, %s67
    %s71 = sphi 0, %s70
    %s87 = sphi 0, %s71
    %s95 = sphi 0, %s97
    %s98 = sphi 0, %s95
    %s99 = sphi 0, %s98
    %s115 = sphi 0, %s99
    %s123 = sphi 0, %s125
    %s126 = sphi 0, %s123
    %s127 = sphi 0, %s126
    %s143 = sphi 0, %s127
  $region4: #{conv_module_forward.2} parent=0 // loop_header_branch
    %13 = sbr.rel (%p11) target = $region8
  $region5: #{conv_module_forward.2} parent=0 // loop_body
    %s15 = ssub.s32 %s10, 1
    %s16 = ssub.s32 %s10, 2
    %s26 = sadd.s32 1, %s19
    %p27 = scmp.ge.s32.totalorder %s26, 2
    %s28 = scalar_select %p27, 0, %s26
    %s29 = sadd.s32 1, %s18
    %s30 = scalar_select %p27, %s29, %s18
    %p31 = scmp.ge.s32.totalorder %s30, 2
    %s32 = scalar_select %p31, 0, %s30
    %s33 = sadd.s32 1, %s17
    %s34 = scalar_select %p31, %s33, %s17
    %p35 = scmp.ge.s32.totalorder %s34, 2
    %s36 = scalar_select %p35, 0, %s34
    %s37 = ssub.s32 %s17, %s36
    %p38 = scmp.eq.s32.totalorder %s37, 0
    %s40 = sadd.s32 %s39, 1
    %s41 = scalar_select %p38, %s39, %s40
    %p44 = pneg %p38
    %p45 = scmp.eq.s32.totalorder %s10, 7
    %p46 = por %p44, %p45
    %p47 = scmp.ne.s32.totalorder %s39, %s42
    %p48 = scmp.eq.s32.totalorder %s10, 0
    %p49 = por %p47, %p48
    %p50 = scmp.ne.s32.totalorder %s39, %s42
    %p51 = scmp.eq.s32.totalorder %s15, 7
    %p52 = por %p50, %p51
    %p53 = scmp.ne.s32.totalorder %s42, %s43
    %p54 = scmp.eq.s32.totalorder %s15, 0
    %p55 = por %p53, %p54
    %p56 = scmp.ne.s32.totalorder %s42, %s43
    %p57 = scmp.eq.s32.totalorder %s16, 7
    %p58 = por %p56, %p57
    %p60 = scmp.ne.s32.totalorder %s43, %s59
    %p61 = scmp.eq.s32.totalorder %s16, 0
    %p62 = por %p60, %p61
    %s63 = ssub.s32 %s18, %s32
    %s64 = ssub.s32 %s19, %s28
    %s65 = sor.u32 %s63, %s64
    %p66 = scmp.eq.s32.totalorder %s65, 0
    %s68 = sadd.s32 %s67, 1
    %s69 = scalar_select %p66, %s67, %s68
    %p72 = pneg %p66
    %p73 = scmp.eq.s32.totalorder %s10, 7
    %p74 = por %p72, %p73
    %p75 = scmp.ne.s32.totalorder %s67, %s70
    %p76 = scmp.eq.s32.totalorder %s10, 0
    %p77 = por %p75, %p76
    %p78 = scmp.ne.s32.totalorder %s67, %s70
    %p79 = scmp.eq.s32.totalorder %s15, 7
    %p80 = por %p78, %p79
    %p81 = scmp.ne.s32.totalorder %s70, %s71
    %p82 = scmp.eq.s32.totalorder %s15, 0
    %p83 = por %p81, %p82
    %p84 = scmp.ne.s32.totalorder %s70, %s71
    %p85 = scmp.eq.s32.totalorder %s16, 7
    %p86 = por %p84, %p85
    %p88 = scmp.ne.s32.totalorder %s71, %s87
    %p89 = scmp.eq.s32.totalorder %s16, 0
    %p90 = por %p88, %p89
    %s91 = ssub.s32 %s18, %s32
    %s92 = ssub.s32 %s17, %s36
    %s93 = sor.u32 %s91, %s92
    %p94 = scmp.eq.s32.totalorder %s93, 0
    %s96 = sadd.s32 %s95, 1
    %s97 = scalar_select %p94, %s95, %s96
    %p100 = pneg %p94
    %p101 = scmp.eq.s32.totalorder %s10, 7
    %p102 = por %p100, %p101
    %p103 = scmp.ne.s32.totalorder %s95, %s98
    %p104 = scmp.eq.s32.totalorder %s10, 0
    %p105 = por %p103, %p104
    %p106 = scmp.ne.s32.totalorder %s95, %s98
    %p107 = scmp.eq.s32.totalorder %s15, 7
    %p108 = por %p106, %p107
    %p109 = scmp.ne.s32.totalorder %s98, %s99
    %p110 = scmp.eq.s32.totalorder %s15, 0
    %p111 = por %p109, %p110
    %p112 = scmp.ne.s32.totalorder %s98, %s99
    %p113 = scmp.eq.s32.totalorder %s16, 7
    %p114 = por %p112, %p113
    %p116 = scmp.ne.s32.totalorder %s99, %s115
    %p117 = scmp.eq.s32.totalorder %s16, 0
    %p118 = por %p116, %p117
    %s119 = ssub.s32 %s18, %s32
    %s120 = ssub.s32 %s17, %s36
    %s121 = sor.u32 %s119, %s120
    %p122 = scmp.eq.s32.totalorder %s121, 0
    %s124 = sadd.s32 %s123, 1
    %s125 = scalar_select %p122, %s123, %s124
    %p128 = pneg %p122
    %p129 = scmp.eq.s32.totalorder %s10, 7
    %p130 = por %p128, %p129
    %p131 = scmp.ne.s32.totalorder %s123, %s126
    %p132 = scmp.eq.s32.totalorder %s10, 0
    %p133 = por %p131, %p132
    %p134 = scmp.ne.s32.totalorder %s123, %s126
    %p135 = scmp.eq.s32.totalorder %s15, 7
    %p136 = por %p134, %p135
    %p137 = scmp.ne.s32.totalorder %s126, %s127
    %p138 = scmp.eq.s32.totalorder %s15, 0
    %p139 = por %p137, %p138
    %p140 = scmp.ne.s32.totalorder %s126, %s127
    %p141 = scmp.eq.s32.totalorder %s16, 7
    %p142 = por %p140, %p141
    %p144 = scmp.ne.s32.totalorder %s127, %s143
    %p145 = scmp.eq.s32.totalorder %s16, 0
    %p146 = por %p144, %p145
    %p147 = scmp.le.s32.totalorder 1, %s10
    %p148 = scmp.lt.s32.totalorder %s10, 9
    %p149 = pnand %p147, %p148
    %p150 = pneg %p149
    // Predicated region
    $region9: #{conv_module_forward.2} parent=5 // pred_check
      _
    $region10: #{conv_module_forward.2} parent=5 // pred_check_branch
      %152 = sbr.rel (%p149) target = $region12
    $region11: #{conv_module_forward.2} parent=5 // pred_region
      %s153 = ssub.s32 %s10, 1
    $region12: #{conv_module_forward.2} parent=5 // pred_fallthru
      _
    %p154 = scmp.lt.s32.totalorder %s10, 8
    // Predicated region
    $region13: #{conv_module_forward.2} parent=5 // pred_check
      %p155 = pneg %p154
    $region14: #{conv_module_forward.2} parent=5 // pred_check_branch
      %157 = sbr.rel (%p155) target = $region16
    $region15: #{conv_module_forward.2} parent=5 // pred_region
      // Predicated region
      $region17: #{conv_module_forward.2} parent=15 // pred_check
        %p158 = pneg %p49
      $region18: #{conv_module_forward.2} parent=15 // pred_check_branch
        %160 = sbr.rel (%p158) target = $region20
      $region19: #{conv_module_forward.2} parent=15 // pred_region
        %p161 = scmp.lt.s32.totalorder %s17, 1
        %s162 = scalar_select %p161, %s17, 1
        %s163 = smul.addr %s162, 8
        %s164 = scalar_lea.vmem %s0, %s163
      $region20: #{conv_module_forward.2} parent=15 // pred_fallthru
        _
      // Predicated region
      $region21: #{conv_module_forward.2} parent=15 // pred_check
        %p165 = pneg %p77
      $region22: #{conv_module_forward.2} parent=15 // pred_check_branch
        %167 = sbr.rel (%p165) target = $region24
      $region23: #{conv_module_forward.2} parent=15 // pred_region
        %p168 = scmp.lt.s32.totalorder %s18, 1
        %s169 = scalar_select %p168, %s18, 1
        %p170 = scmp.lt.s32.totalorder %s19, 1
        %s171 = scalar_select %p170, %s19, 1
        %s172 = smul.addr %s169, 2
        %s173 = sadd.s32 %s171, %s172
        %s174 = smul.addr %s173, 4
        %s175 = scalar_lea.vmem %s1, %s174
      $region24: #{conv_module_forward.2} parent=15 // pred_fallthru
        _
    $region16: #{conv_module_forward.2} parent=5 // pred_fallthru
      _
    %p176 = scmp.le.s32.totalorder 1, %s10
    %p177 = scmp.lt.s32.totalorder %s10, 9
    %p178 = pnand %p176, %p177
    %p179 = pneg %p178
    // Predicated region
    $region25: #{conv_module_forward.2} parent=5 // pred_check
      _
    $region26: #{conv_module_forward.2} parent=5 // pred_check_branch
      %181 = sbr.rel (%p178) target = $region28
    $region27: #{conv_module_forward.2} parent=5 // pred_region
      %s182 = ssub.s32 %s10, 1
      %p183 = scmp.lt.s32.totalorder %s20, 1
      %s184 = scalar_select %p183, %s20, 1
      %s185 = smul.addr %s184, 8
      %s186 = scalar_lea.vmem %s0, %s185
      %p187 = pneg %p55
      %p188 = pneg %p52
      %p189 = scmp.lt.s32.totalorder %s21, 1
      %s190 = scalar_select %p189, %s21, 1
      %p191 = scmp.lt.s32.totalorder %s22, 1
      %s192 = scalar_select %p191, %s22, 1
      %s193 = smul.addr %s190, 2
      %s194 = sadd.s32 %s192, %s193
      %s195 = smul.addr %s194, 4
      %s196 = scalar_lea.vmem %s1, %s195
      %p197 = pneg %p83
      %p198 = pneg %p80
      %p199 = pneg %p111
      %p200 = pneg %p108
      %p201 = scmp.lt.s32.totalorder %s21, 1
      %s202 = scalar_select %p201, %s21, 1
      %p203 = scmp.lt.s32.totalorder %s20, 1
      %s204 = scalar_select %p203, %s20, 1
      %s205 = smul.addr %s202, 2
      %s206 = sadd.s32 %s204, %s205
      %s207 = smul.addr %s206, 8
      %s208 = scalar_lea.vmem %s2, %s207
      %p209 = pneg %p139
      %p210 = pneg %p136
      %p211 = scmp.lt.s32.totalorder %s21, 1
      %s212 = scalar_select %p211, %s21, 1
      %p213 = scmp.lt.s32.totalorder %s20, 1
      %s214 = scalar_select %p213, %s20, 1
      %s215 = smul.addr %s212, 2
      %s216 = sadd.s32 %s214, %s215
      %s217 = smul.addr %s216, 8
      %s218 = scalar_lea.vmem %s3, %s217
      %p219 = scmp.lt.s32.totalorder %s20, 1
      %s220 = scalar_select %p219, %s20, 1
      %s221 = smul.addr %s220, 8
      %s222 = scalar_lea.vmem %s0, %s221
      %p223 = scmp.lt.s32.totalorder %s21, 1
      %s224 = scalar_select %p223, %s21, 1
      %p225 = scmp.lt.s32.totalorder %s22, 1
      %s226 = scalar_select %p225, %s22, 1
      %s227 = smul.addr %s224, 2
      %s228 = sadd.s32 %s226, %s227
      %s229 = smul.addr %s228, 4
      %s230 = scalar_lea.vmem %s1, %s229
      %p231 = scmp.lt.s32.totalorder %s21, 1
      %s232 = scalar_select %p231, %s21, 1
      %p233 = scmp.lt.s32.totalorder %s20, 1
      %s234 = scalar_select %p233, %s20, 1
      %s235 = smul.addr %s232, 2
      %s236 = sadd.s32 %s234, %s235
      %s237 = smul.addr %s236, 8
      %s238 = scalar_lea.vmem %s2, %s237
      %p239 = scmp.lt.s32.totalorder %s21, 1
      %s240 = scalar_select %p239, %s21, 1
      %p241 = scmp.lt.s32.totalorder %s20, 1
      %s242 = scalar_select %p241, %s20, 1
      %s243 = smul.addr %s240, 2
      %s244 = sadd.s32 %s242, %s243
      %s245 = smul.addr %s244, 8
      %s246 = scalar_lea.vmem %s3, %s245
      %p247 = scmp.eq.s32.totalorder %s22, 0
      // Predicated region
      $region29: #{conv_module_forward.2} parent=27 // pred_check
        %p248 = pneg %p247
      $region30: #{conv_module_forward.2} parent=27 // pred_check_branch
        %250 = sbr.rel (%p248) target = $region32
      $region31: #{conv_module_forward.2} parent=27 // pred_region
        %251 = vst [vmem:[%s238] sm:$0xff] 0.0
        %252 = vst [vmem:[%s246] sm:$0xff] 0.0
      $region32: #{conv_module_forward.2} parent=27 // pred_fallthru
        _
      %v253 = vld [vmem:[%s222] sm:$0xff]
      %v254 = vld [vmem:[%s230] sm:$0xf]
      %vm255 = vcmask 31744
      %v257 = vsel %vm255, %v253, 0
      %vm259 = vcmask 1043456
      %v261 = vsel %vm259, %v254, 0
      %263 = vmatprep.subr.mxu0 0.0
      %264 = vmatpush1.msra.mxu0 %v261
      %265 = vmatprep.subr.mxu0 0.0
      %266 = vmatpush1.msra.mxu0 0.0
      %267 = vmatprep.subr.mxu0 0.0
      %268 = vmatpush1.msra.mxu0 0.0
      %269 = vmatprep.subr.mxu0 0.0
      %270 = vmatpush1.msra.mxu0 0.0
      %271 = vmatprep.subr.mxu0 0.0
      %272 = vmatpush1.msra.mxu0 0.0
      %273 = vmatprep.subr.mxu0 0.0
      %274 = vmatpush1.msra.mxu0 0.0
      %275 = vmatprep.subr.mxu0 0.0
      %276 = vmatpush1.msra.mxu0 0.0
      %277 = vmatprep.subr.mxu0 0.0
      %278 = vmatpush1.msra.mxu0 0.0
      %279 = vmatprep.subr.mxu0 0.0
      %280 = vmatpush1.msra.mxu0 0.0
      %281 = vmatprep.subr.mxu0 0.0
      %282 = vmatpush1.msra.mxu0 0.0
      %283 = vmatprep.subr.mxu0 0.0
      %284 = vmatpush1.msra.mxu0 0.0
      %285 = vmatprep.subr.mxu0 0.0
      %286 = vmatpush1.msra.mxu0 0.0
      %287 = vmatprep.subr.mxu0 0.0
      %288 = vmatpush1.msra.mxu0 0.0
      %289 = vmatprep.subr.mxu0 0.0
      %290 = vmatpush1.msra.mxu0 0.0
      %291 = vmatprep.subr.mxu0 0.0
      %292 = vmatpush1.msra.mxu0 0.0
      %293 = vmatprep.subr.mxu0 0.0
      %294 = vmatpush1.msra.mxu0 0.0
      %295 = vmatprep.subr.mxu0 0.0
      %296 = vmatpush1.msra.mxu0 0.0
      %297 = vmatprep.subr.mxu0 0.0
      %298 = vmatpush1.msra.mxu0 0.0
      %299 = vmatprep.subr.mxu0 0.0
      %300 = vmatpush1.msra.mxu0 0.0
      %301 = vmatprep.subr.mxu0 0.0
      %302 = vmatpush1.msra.mxu0 0.0
      %303 = vmatprep.subr.mxu0 0.0
      %304 = vmatpush1.msra.mxu0 0.0
      %305 = vmatprep.subr.mxu0 0.0
      %306 = vmatpush1.msra.mxu0 0.0
      %307 = vmatprep.subr.mxu0 0.0
      %308 = vmatpush1.msra.mxu0 0.0
      %309 = vmatprep.subr.mxu0 0.0
      %310 = vmatpush1.msra.mxu0 0.0
      %311 = vmatprep.subr.mxu0 0.0
      %312 = vmatpush1.msra.mxu0 0.0
      %313 = vmatprep.subr.mxu0 0.0
      %314 = vmatpush1.msra.mxu0 0.0
      %315 = vmatprep.subr.mxu0 0.0
      %316 = vmatpush1.msra.mxu0 0.0
      %317 = vmatprep.subr.mxu0 0.0
      %318 = vmatpush1.msra.mxu0 0.0
      %319 = vmatprep.subr.mxu0 0.0
      %320 = vmatpush1.msra.mxu0 0.0
      %321 = vmatprep.subr.mxu0 0.0
      %322 = vmatpush1.msra.mxu0 0.0
      %323 = vmatprep.subr.mxu0 0.0
      %324 = vmatpush1.msra.mxu0 0.0
      %325 = vmatprep.subr.mxu0 0.0
      %326 = vmatpush1.msra.mxu0 0.0
      %327 = vmatprep.mubr.f32.mxu0 0.0
      %328 = vmatmul.mubr.f32.gmra.mrb[0].mxu0 %v257
      %v329 = vpop.f32.mrb[0].mxu0
      %v330 = vadd.f32 0.0, %v329
      %v331 = vpop.f32.mrb[0].mxu0
      %332 = vdwg.mxu0
      %v333 = vadd.f32 %v330, 0.0
      %v334 = vmul.f32 %v330, %v330
      %v335 = vadd.f32 %v334, 0.0
      %v336 = vld [vmem:[%s238] sm:$0xff]
      %v337 = vadd.f32 %v336, %v333
      %338 = vst [vmem:[%s238] sm:$0xff] %v337
      %v339 = vld [vmem:[%s246] sm:$0xff]
      %v340 = vadd.f32 %v339, %v335
      %341 = vst [vmem:[%s246] sm:$0xff] %v340
      %p342 = scmp.lt.s32.totalorder %s21, 1
      %s343 = scalar_select %p342, %s21, 1
      %p344 = scmp.lt.s32.totalorder %s20, 1
      %s345 = scalar_select %p344, %s20, 1
      %s346 = smul.addr %s343, 2
      %s347 = sadd.s32 %s345, %s346
      %s348 = smul.addr %s347, 8
      %s349 = scalar_lea.vmem %s2, %s348
      %p350 = scmp.lt.s32.totalorder %s21, 1
      %s351 = scalar_select %p350, %s21, 1
      %p352 = scmp.lt.s32.totalorder %s20, 1
      %s353 = scalar_select %p352, %s20, 1
      %s354 = smul.addr %s351, 2
      %s355 = sadd.s32 %s353, %s354
      %s356 = smul.addr %s355, 8
      %s357 = scalar_lea.vmem %s3, %s356
      // Predicated region
      $region33: #{conv_module_forward.2} parent=27 // pred_check
        %p358 = pneg %p108
      $region34: #{conv_module_forward.2} parent=27 // pred_check_branch
        %360 = sbr.rel (%p358) target = $region36
      $region35: #{conv_module_forward.2} parent=27 // pred_region
        _
      $region36: #{conv_module_forward.2} parent=27 // pred_fallthru
        _
      // Predicated region
      $region37: #{conv_module_forward.2} parent=27 // pred_check
        %p361 = pneg %p136
      $region38: #{conv_module_forward.2} parent=27 // pred_check_branch
        %363 = sbr.rel (%p361) target = $region40
      $region39: #{conv_module_forward.2} parent=27 // pred_region
        _
      $region40: #{conv_module_forward.2} parent=27 // pred_fallthru
        _
    $region28: #{conv_module_forward.2} parent=5 // pred_fallthru
      _
    %p364 = scmp.le.s32.totalorder 2, %s10
    // Predicated region
    $region41: #{conv_module_forward.2} parent=5 // pred_check
      %p365 = pneg %p364
    $region42: #{conv_module_forward.2} parent=5 // pred_check_branch
      %367 = sbr.rel (%p365) target = $region44
    $region43: #{conv_module_forward.2} parent=5 // pred_region
      %s368 = ssub.s32 %s10, 2
      // Predicated region
      $region45: #{conv_module_forward.2} parent=43 // pred_check
        %p369 = pneg %p114
      $region46: #{conv_module_forward.2} parent=43 // pred_check_branch
        %371 = sbr.rel (%p369) target = $region48
      $region47: #{conv_module_forward.2} parent=43 // pred_region
        %p372 = scmp.lt.s32.totalorder %s24, 1
        %s373 = scalar_select %p372, %s24, 1
        %p374 = scmp.lt.s32.totalorder %s23, 1
        %s375 = scalar_select %p374, %s23, 1
        %s376 = smul.addr %s373, 2
        %s377 = sadd.s32 %s375, %s376
        %s378 = smul.addr %s377, 8
        %s379 = scalar_lea.vmem %s2, %s378
      $region48: #{conv_module_forward.2} parent=43 // pred_fallthru
        _
      // Predicated region
      $region49: #{conv_module_forward.2} parent=43 // pred_check
        %p380 = pneg %p142
      $region50: #{conv_module_forward.2} parent=43 // pred_check_branch
        %382 = sbr.rel (%p380) target = $region52
      $region51: #{conv_module_forward.2} parent=43 // pred_region
        %p383 = scmp.lt.s32.totalorder %s24, 1
        %s384 = scalar_select %p383, %s24, 1
        %p385 = scmp.lt.s32.totalorder %s23, 1
        %s386 = scalar_select %p385, %s23, 1
        %s387 = smul.addr %s384, 2
        %s388 = sadd.s32 %s386, %s387
        %s389 = smul.addr %s388, 8
        %s390 = scalar_lea.vmem %s3, %s389
      $region52: #{conv_module_forward.2} parent=43 // pred_fallthru
        _
    $region44: #{conv_module_forward.2} parent=5 // pred_fallthru
      _
  $region6: #{conv_module_forward.2} parent=0 // loop_footer
    %s14 = sadd.s32 1, %s10
  $region7: #{conv_module_forward.2} parent=0 // loop_footer_branch
    %9 = sbr.rel target = $region3
  $region8: #{conv_module_forward.2} parent=0 // loop_exit
    _

</llo_original>
